<compile_context>
chip_gen: v5e
topology: v5e:2x2
jax: 0.10.0
libtpu: 0.0.40
codegen_flags: <defaults>
</compile_context>

<pallas_src>
import functools

import jax
import jax.numpy as jnp
from jax.experimental import pallas as pl
from jax.experimental.pallas import tpu as pltpu


def _layernorm_kernel(x_ref, a_ref, b_ref, o_ref, *, eps, d_model):
    # x_ref: (tile_rows, d_model); a_ref/b_ref: (1, d_model) (broadcast over rows)
    x = x_ref[...].astype(jnp.float32)
    mean = jnp.mean(x, axis=-1, keepdims=True)
    diff = x - mean
    # torch.std uses Bessel's correction (ddof=1).
    var = jnp.sum(diff * diff, axis=-1, keepdims=True) * (1.0 / (d_model - 1))
    std = jnp.sqrt(var)
    # One exact reciprocal per row (cheap, keeps 1e-5 tolerance; kernel is DMA-bound).
    inv = pl.reciprocal(std + eps)
    a = a_ref[...].astype(jnp.float32)
    b = b_ref[...].astype(jnp.float32)
    o_ref[...] = (diff * inv * a + b).astype(o_ref.dtype)


def _vmem_capacity_bytes():
    """Physical VMEM per TensorCore; conservative 64 MiB (v7x) if unknown."""
    try:
        return int(pltpu.get_tpu_info().vmem_capacity_bytes)
    except Exception:
        return 64 * 1024 * 1024


def _choose_tiling(rows, d_model, dtype):
    """Pick (tile_rows, vmem_limit_bytes) for a bandwidth-bound row-wise kernel."""
    itemsize = jnp.dtype(dtype).itemsize
    # Sublane-packing granule of the I/O dtype: f32->8, bf16->16, int8/fp8->32.
    granule = {1: 32, 2: 16}.get(itemsize, 8)

    vmem_cap = _vmem_capacity_bytes()
    big_vmem = vmem_cap >= 100 * 1024 * 1024          # v5e / v6e (128 MiB)
    tile_bytes_f32 = (8 if big_vmem else 4) * 1024 * 1024  # f32 working-tile budget

    # Budget-based tile (largest in-kernel temp is the f32 upcast of the tile).
    t = max(granule, tile_bytes_f32 // (d_model * 4))
    # Keep >= ~4 grid blocks when rows permit: pipelining overlap + both v7x TCs.
    t = min(t, max(granule, pl.cdiv(rows, 4)))
    # Round down to the dtype's sublane granule.
    t = max(granule, (t // granule) * granule)
    # No point exceeding the (granule-rounded) data itself.
    t = min(t, pl.cdiv(rows, granule) * granule)

    # VMEM footprint: double-buffered in + out tiles, ~3 f32 temps, compiler margin.
    io_bytes = 4 * t * d_model * itemsize
    tmp_bytes = 3 * t * d_model * 4
    footprint = io_bytes + tmp_bytes + 4 * 1024 * 1024
    cap = (96 if big_vmem else 48) * 1024 * 1024
    vmem_limit = int(min(max(footprint, 32 * 1024 * 1024), cap))
    return t, vmem_limit


def layer_norm_pallas(x, a, b, eps, *, tile_rows=None):
    """x: (batch, length, d_model); a, b: (d_model,). Returns same shape/dtype as x."""
    batch, length, d_model = x.shape
    rows = batch * length

    auto_tile, vmem_limit = _choose_tiling(rows, d_model, x.dtype)
    if tile_rows is None:
        tile_rows = auto_tile

    # No explicit padding: the ragged last block (if any) is handled by Pallas
    # boundary masking; phantom rows never contribute to any stored value.
    n_blocks = pl.cdiv(rows, tile_rows)

    x2 = x.reshape(rows, d_model)
    a2 = a.reshape(1, d_model)
    b2 = b.reshape(1, d_model)

    kernel = functools.partial(_layernorm_kernel, eps=eps, d_model=d_model)

    out2 = pl.pallas_call(
        kernel,
        out_shape=jax.ShapeDtypeStruct((rows, d_model), x.dtype),
        grid_spec=pltpu.PrefetchScalarGridSpec(
            num_scalar_prefetch=0,
            grid=(n_blocks,),
            in_specs=[
                pl.BlockSpec((tile_rows, d_model), lambda i: (i, 0)),
                pl.BlockSpec((1, d_model), lambda i: (0, 0)),   # resident scale
                pl.BlockSpec((1, d_model), lambda i: (0, 0)),   # resident bias
            ],
            out_specs=pl.BlockSpec((tile_rows, d_model), lambda i: (i, 0)),
        ),
        compiler_params=pltpu.CompilerParams(
            dimension_semantics=("parallel",),   # shards rows across v7x's 2 TCs
            vmem_limit_bytes=vmem_limit,         # derived from real footprint
        ),
    )(x2, a2, b2)

    return out2.reshape(batch, length, d_model)


def layer_norm_ref(x, a, b, eps):
    xf = x.astype(jnp.float32)
    mean = jnp.mean(xf, axis=-1, keepdims=True)
    std = jnp.std(xf, axis=-1, keepdims=True, ddof=1)  # matches torch.std (unbiased)
    return ((xf - mean) / (std + eps) * a + b).astype(x.dtype)


if __name__ == "__main__":
    # Small config consistent with the module defaults (d_model=768).
    batch, length, d_model = 2, 8, 768
    ln_eps = 1e-6

    key = jax.random.PRNGKey(0)
    x = jax.random.normal(key, (batch, length, d_model), dtype=jnp.float32)

    # Deterministic parameter init, matching nn.Parameter(torch.ones/zeros(d_model)).
    a = jnp.ones((d_model,), dtype=jnp.float32)
    b = jnp.zeros((d_model,), dtype=jnp.float32)

    out = layer_norm_pallas(x, a, b, ln_eps)
    out = jax.block_until_ready(out)

    ref = layer_norm_ref(x, a, b, ln_eps)
    assert out.shape == (batch, length, d_model)
    assert jnp.allclose(out, ref, atol=1e-5, rtol=1e-5), "mismatch vs reference"

    print("KERNEL_OK")
</pallas_src>

<mosaic_0001>
module attributes {stable_mosaic.version = 11 : i64} {
  func.func @_layernorm_kernel(%arg0: i32, %arg1: memref<8x768xf32, #tpu.memory_space<vmem>>, %arg2: memref<1x768xf32, #tpu.memory_space<vmem>>, %arg3: memref<1x768xf32, #tpu.memory_space<vmem>>, %arg4: memref<8x768xf32, #tpu.memory_space<vmem>>) attributes {dimension_semantics = [#tpu.dimension_semantics<parallel>], iteration_bounds = array<i64: 2>, scalar_prefetch = 0 : i64, scratch_operands = 0 : i64, tpu.core_type = #tpu.core_type<tc>, window_params = [{transform_indices = @transform_0, window_bounds = array<i64: 8, 768>}, {pipeline_mode = #tpu.pipeline_mode<synchronous>, transform_indices = @transform_1, window_bounds = array<i64: 1, 768>}, {pipeline_mode = #tpu.pipeline_mode<synchronous>, transform_indices = @transform_2, window_bounds = array<i64: 1, 768>}, {transform_indices = @transform_3, window_bounds = array<i64: 8, 768>}]} {
    %c0 = arith.constant 0 : index
    %c0_0 = arith.constant 0 : index
    %0 = vector.load %arg1[%c0, %c0_0] : memref<8x768xf32, #tpu.memory_space<vmem>>, vector<8x768xf32>
    %cst = arith.constant dense<0.000000e+00> : vector<8xf32>
    %1 = vector.multi_reduction <add>, %0, %cst [1] : vector<8x768xf32> to vector<8xf32>
    %2 = vector.shape_cast %1 : vector<8xf32> to vector<8x1xf32>
    %cst_1 = arith.constant 7.680000e+02 : f32
    %3 = vector.broadcast %cst_1 : f32 to vector<8x1xf32>
    %4 = arith.divf %2, %3 : vector<8x1xf32>
    %5 = vector.broadcast %4 : vector<8x1xf32> to vector<8x768xf32>
    %6 = arith.subf %0, %5 : vector<8x768xf32>
    %7 = arith.mulf %6, %6 : vector<8x768xf32>
    %cst_2 = arith.constant dense<0.000000e+00> : vector<8xf32>
    %8 = vector.multi_reduction <add>, %7, %cst_2 [1] : vector<8x768xf32> to vector<8xf32>
    %9 = vector.shape_cast %8 : vector<8xf32> to vector<8x1xf32>
    %cst_3 = arith.constant 0.00130378094 : f32
    %10 = vector.broadcast %cst_3 : f32 to vector<8x1xf32>
    %11 = arith.mulf %9, %10 : vector<8x1xf32>
    %12 = math.sqrt %11 : vector<8x1xf32>
    %cst_4 = arith.constant 9.99999997E-7 : f32
    %13 = vector.broadcast %cst_4 : f32 to vector<8x1xf32>
    %14 = arith.addf %12, %13 : vector<8x1xf32>
    %15 = tpu.reciprocal %14 : vector<8x1xf32> -> vector<8x1xf32>
    %c0_5 = arith.constant 0 : index
    %c0_6 = arith.constant 0 : index
    %16 = vector.load %arg2[%c0_5, %c0_6] : memref<1x768xf32, #tpu.memory_space<vmem>>, vector<1x768xf32>
    %c0_7 = arith.constant 0 : index
    %c0_8 = arith.constant 0 : index
    %17 = vector.load %arg3[%c0_7, %c0_8] : memref<1x768xf32, #tpu.memory_space<vmem>>, vector<1x768xf32>
    %18 = vector.broadcast %15 : vector<8x1xf32> to vector<8x768xf32>
    %19 = arith.mulf %6, %18 : vector<8x768xf32>
    %20 = vector.broadcast %16 : vector<1x768xf32> to vector<8x768xf32>
    %21 = arith.mulf %19, %20 : vector<8x768xf32>
    %22 = vector.broadcast %17 : vector<1x768xf32> to vector<8x768xf32>
    %23 = arith.addf %21, %22 : vector<8x768xf32>
    %c0_9 = arith.constant 0 : index
    %c0_10 = arith.constant 0 : index
    %24 = vector.load %arg4[%c0_9, %c0_10] : memref<8x768xf32, #tpu.memory_space<vmem>>, vector<8x768xf32>
    tpu.vector_store %arg4[%c0_9, %c0_10], %23 {strides = array<i32>} : memref<8x768xf32, #tpu.memory_space<vmem>>, vector<8x768xf32>,
    return
  }
  func.func @transform_0(%arg0: i32) -> (i32, i32) {
    %c0_i32 = arith.constant 0 : i32
    %c0_i32_0 = arith.constant 0 : i32
    return %arg0, %c0_i32 : i32, i32
  }
  func.func @transform_1(%arg0: i32) -> (i32, i32) {
    %c0_i32 = arith.constant 0 : i32
    %c0_i32_0 = arith.constant 0 : i32
    %c0_i32_1 = arith.constant 0 : i32
    return %c0_i32, %c0_i32_0 : i32, i32
  }
  func.func @transform_2(%arg0: i32) -> (i32, i32) {
    %c0_i32 = arith.constant 0 : i32
    %c0_i32_0 = arith.constant 0 : i32
    %c0_i32_1 = arith.constant 0 : i32
    return %c0_i32, %c0_i32_0 : i32, i32
  }
  func.func @transform_3(%arg0: i32) -> (i32, i32) {
    %c0_i32 = arith.constant 0 : i32
    %c0_i32_0 = arith.constant 0 : i32
    return %arg0, %c0_i32 : i32, i32
  }
}

</mosaic_0001>

<llo_original>
// kernel: tpu_custom_call.1
$region0: #{tpu_custom_call.1}
  #allocation0 [shape = 'u32[]', space=smem, size = 0x4, offset = 0x4, fixed_abs, tag = 'smem constant byte address 0x4 - core index']
  #allocation1 [shape = 'u32[72,128]{1,0:T(1,128)}', space=vmem, size = 0x9000, scoped, tag = 'internal scratch']
  %s0 = inlined_call_operand.hbm [shape: f32[16,768], index: 0, kind: input, shape index: {}]
  %s1 = inlined_call_operand.hbm [shape: f32[1,768], index: 1, kind: input, shape index: {}]
  %s2 = inlined_call_operand.hbm [shape: f32[1,768], index: 2, kind: input, shape index: {}]
  %s3 = inlined_call_operand.hbm [shape: f32[16,768], index: 3, kind: output, shape index: {}]
  %s4 = sld [smem:[#allocation0]]
  $region57: #{tpu_custom_call.1} parent=0
    _
  %s6 = ssub.s32 1, %s4
  %s7 = scalar_select 0, %s6, %s4
  $region1: #{tpu_custom_call.1} parent=0
    #allocation2 [shape = 'u8[49152]{0}', space=vmem, size = 0xc000, scoped, tag = 'input window, operand 0']
    #allocation3 [shape = 's32[2]{0}', space=sflag, size = 0x8, scoped, tag = 'scoped memory for tpu_custom_call.1']
    #allocation4 [shape = 's32[2]{0}', space=sflag, size = 0x8, scoped, tag = 'scoped memory for tpu_custom_call.1']
    #allocation5 [shape = 'u8[3072]{0}', space=vmem, size = 0xc00, scoped, tag = 'input window, operand 1, single buffered']
    #allocation6 [shape = 's32[1]{0}', space=sflag, size = 0x4, scoped, tag = 'scoped memory for tpu_custom_call.1']
    #allocation7 [shape = 'u8[3072]{0}', space=vmem, size = 0xc00, scoped, tag = 'input window, operand 2, single buffered']
    #allocation8 [shape = 'u8[49152]{0}', space=vmem, size = 0xc000, scoped, tag = 'output window, operand 0']
    %8 = vsyncpa [#allocation3], 0
    %s9 = scalar_lea.sflag [#allocation3], 1
    %10 = vsyncpa %s9, 0
    %11 = vsyncpa [#allocation6], 0
    %12 = vsyncpa [#allocation4], 0
    %s13 = scalar_lea.sflag [#allocation4], 1
    %14 = vsyncpa %s13, 0
    loop: start=0, step=1, limit=4
    $region2: #{tpu_custom_call.1} parent=1 // loop_pre_header
      _
    $region3: #{tpu_custom_call.1} parent=1 // loop_header
      %s16 = sphi 0, %s20
      %p17 = scmp.ge.s32.totalorder %s16, 4
      %s26 = sphi 0, %s28
      %s29 = sphi 0, %s26
      %s30 = sphi 0, %s29
      %s46 = sphi 0, %s30
      %s50 = sphi 0, %s50
      %s52 = sphi 0, %s50
      %s53 = sphi 0, %s52
      %s67 = sphi 0, %s53
      %s71 = sphi 0, %s71
      %s73 = sphi 0, %s71
      %s74 = sphi 0, %s73
      %s88 = sphi 0, %s74
      %s94 = sphi 0, %s96
      %s97 = sphi 0, %s94
      %s98 = sphi 0, %s97
      %s114 = sphi 0, %s98
    $region4: #{tpu_custom_call.1} parent=1 // loop_header_branch
      %19 = sbr.rel (%p17) target = $region8
    $region5: #{tpu_custom_call.1} parent=1 // loop_body
      %s21 = ssub.s32 %s16, 1
      %s22 = ssub.s32 %s16, 2
      %s23 = sadd.s32 %s16, 1
      %s24 = ssub.s32 %s16, %s23
      %p25 = scmp.eq.s32.totalorder %s24, 0
      %s27 = sadd.s32 %s26, 1
      %s28 = scalar_select %p25, %s26, %s27
      %p31 = pneg %p25
      %p32 = scmp.eq.s32.totalorder %s16, 1
      %p33 = por %p31, %p32
      %p34 = scmp.ne.s32.totalorder %s26, %s29
      %p35 = scmp.eq.s32.totalorder %s16, 0
      %p36 = por %p34, %p35
      %p37 = scmp.ne.s32.totalorder %s26, %s29
      %p38 = scmp.eq.s32.totalorder %s21, 1
      %p39 = por %p37, %p38
      %p40 = scmp.ne.s32.totalorder %s29, %s30
      %p41 = scmp.eq.s32.totalorder %s21, 0
      %p42 = por %p40, %p41
      %p43 = scmp.ne.s32.totalorder %s29, %s30
      %p44 = scmp.eq.s32.totalorder %s22, 1
      %p45 = por %p43, %p44
      %p47 = scmp.ne.s32.totalorder %s30, %s46
      %p48 = scmp.eq.s32.totalorder %s22, 0
      %p49 = por %p47, %p48
      %s51 = sadd.s32 %s50, 1
      %p54 = scmp.eq.s32.totalorder %s16, 1
      %p55 = scmp.ne.s32.totalorder %s50, %s52
      %p56 = scmp.eq.s32.totalorder %s16, 0
      %p57 = por %p55, %p56
      %p58 = scmp.ne.s32.totalorder %s50, %s52
      %p59 = scmp.eq.s32.totalorder %s21, 1
      %p60 = por %p58, %p59
      %p61 = scmp.ne.s32.totalorder %s52, %s53
      %p62 = scmp.eq.s32.totalorder %s21, 0
      %p63 = por %p61, %p62
      %p64 = scmp.ne.s32.totalorder %s52, %s53
      %p65 = scmp.eq.s32.totalorder %s22, 1
      %p66 = por %p64, %p65
      %p68 = scmp.ne.s32.totalorder %s53, %s67
      %p69 = scmp.eq.s32.totalorder %s22, 0
      %p70 = por %p68, %p69
      %s72 = sadd.s32 %s71, 1
      %p75 = scmp.eq.s32.totalorder %s16, 1
      %p76 = scmp.ne.s32.totalorder %s71, %s73
      %p77 = scmp.eq.s32.totalorder %s16, 0
      %p78 = por %p76, %p77
      %p79 = scmp.ne.s32.totalorder %s71, %s73
      %p80 = scmp.eq.s32.totalorder %s21, 1
      %p81 = por %p79, %p80
      %p82 = scmp.ne.s32.totalorder %s73, %s74
      %p83 = scmp.eq.s32.totalorder %s21, 0
      %p84 = por %p82, %p83
      %p85 = scmp.ne.s32.totalorder %s73, %s74
      %p86 = scmp.eq.s32.totalorder %s22, 1
      %p87 = por %p85, %p86
      %p89 = scmp.ne.s32.totalorder %s74, %s88
      %p90 = scmp.eq.s32.totalorder %s22, 0
      %p91 = por %p89, %p90
      %s92 = ssub.s32 %s16, %s23
      %p93 = scmp.eq.s32.totalorder %s92, 0
      %s95 = sadd.s32 %s94, 1
      %s96 = scalar_select %p93, %s94, %s95
      %p99 = pneg %p93
      %p100 = scmp.eq.s32.totalorder %s16, 1
      %p101 = por %p99, %p100
      %p102 = scmp.ne.s32.totalorder %s94, %s97
      %p103 = scmp.eq.s32.totalorder %s16, 0
      %p104 = por %p102, %p103
      %p105 = scmp.ne.s32.totalorder %s94, %s97
      %p106 = scmp.eq.s32.totalorder %s21, 1
      %p107 = por %p105, %p106
      %p108 = scmp.ne.s32.totalorder %s97, %s98
      %p109 = scmp.eq.s32.totalorder %s21, 0
      %p110 = por %p108, %p109
      %p111 = scmp.ne.s32.totalorder %s97, %s98
      %p112 = scmp.eq.s32.totalorder %s22, 1
      %p113 = por %p111, %p112
      %p115 = scmp.ne.s32.totalorder %s98, %s114
      %p116 = scmp.eq.s32.totalorder %s22, 0
      %p117 = por %p115, %p116
      %p118 = scmp.le.s32.totalorder 1, %s16
      %p119 = scmp.lt.s32.totalorder %s16, 3
      %p120 = pnand %p118, %p119
      %p121 = pneg %p120
      // Predicated region
      $region9: #{tpu_custom_call.1} parent=5 // pred_check
        _
      $region10: #{tpu_custom_call.1} parent=5 // pred_check_branch
        %123 = sbr.rel (%p120) target = $region12
      $region11: #{tpu_custom_call.1} parent=5 // pred_region
        %s124 = ssub.s32 %s16, 1
        // Predicated region
        $region13: #{tpu_custom_call.1} parent=11 // pred_check
          %p125 = pneg %p63
        $region14: #{tpu_custom_call.1} parent=11 // pred_check_branch
          %127 = sbr.rel (%p125) target = $region16
        $region15: #{tpu_custom_call.1} parent=11 // pred_region
          %129 = vsyncadd [#allocation6], 0
          %s131 = sshll.u32 %s1, 4
          %s132 = int_to_ptr.hbm [resolvable:$true] %s131
          %s133 = sshll.u32 [#allocation5], 4
          %s134 = int_to_ptr.vmem [resolvable:$true] %s133
          %136 = dma.hbm_to_vmem [thread:$0]  %s132, 96, %s134, [#allocation6]
        $region16: #{tpu_custom_call.1} parent=11 // pred_fallthru
          _
        // Predicated region
        $region17: #{tpu_custom_call.1} parent=11 // pred_check
          %p137 = pneg %p84
        $region18: #{tpu_custom_call.1} parent=11 // pred_check_branch
          %139 = sbr.rel (%p137) target = $region20
        $region19: #{tpu_custom_call.1} parent=11 // pred_region
          %141 = vsyncadd [#allocation6], 0
          %s143 = sshll.u32 %s2, 4
          %s144 = int_to_ptr.hbm [resolvable:$true] %s143
          %s145 = sshll.u32 [#allocation7], 4
          %s146 = int_to_ptr.vmem [resolvable:$true] %s145
          %148 = dma.hbm_to_vmem [thread:$0]  %s144, 96, %s146, [#allocation6]
        $region20: #{tpu_custom_call.1} parent=11 // pred_fallthru
          _
      $region12: #{tpu_custom_call.1} parent=5 // pred_fallthru
        _
      %p149 = scmp.lt.s32.totalorder %s16, 2
      // Predicated region
      $region21: #{tpu_custom_call.1} parent=5 // pred_check
        %p150 = pneg %p149
      $region22: #{tpu_custom_call.1} parent=5 // pred_check_branch
        %152 = sbr.rel (%p150) target = $region24
      $region23: #{tpu_custom_call.1} parent=5 // pred_region
        // Predicated region
        $region25: #{tpu_custom_call.1} parent=23 // pred_check
          %p153 = pneg %p36
        $region26: #{tpu_custom_call.1} parent=23 // pred_check_branch
          %155 = sbr.rel (%p153) target = $region28
        $region27: #{tpu_custom_call.1} parent=23 // pred_region
          %s156 = sand.u32 %s26, 1
          %s157 = scalar_lea.sflag [#allocation3], %s156
          %s158 = sand.u32 %s26, 1
          %s159 = smul.addr %s158, 48
          %s160 = scalar_lea.vmem [#allocation2], %s159
          %162 = vsyncadd %s157, 0
          %s163 = smul.addr %s16, 6
          %s164 = smul.addr %s163, 8
          %s165 = scalar_lea.hbm %s0, %s164
          %s167 = sshll.u32 %s165, 4
          %s168 = int_to_ptr.hbm [resolvable:$true] %s167
          %s169 = sshll.u32 %s160, 4
          %s170 = int_to_ptr.vmem [resolvable:$true] %s169
          %172 = dma.hbm_to_vmem [thread:$0]  %s168, 768, %s170, %s157
        $region28: #{tpu_custom_call.1} parent=23 // pred_fallthru
          _
      $region24: #{tpu_custom_call.1} parent=5 // pred_fallthru
        _
      %p173 = scmp.le.s32.totalorder 1, %s16
      %p174 = scmp.lt.s32.totalorder %s16, 3
      %p175 = pnand %p173, %p174
      %p176 = pneg %p175
      // Predicated region
      $region29: #{tpu_custom_call.1} parent=5 // pred_check
        _
      $region30: #{tpu_custom_call.1} parent=5 // pred_check_branch
        %178 = sbr.rel (%p175) target = $region32
      $region31: #{tpu_custom_call.1} parent=5 // pred_region
        %s179 = ssub.s32 %s16, 1
        %s180 = sand.u32 %s29, 1
        %s181 = scalar_lea.sflag [#allocation3], %s180
        %s182 = sand.u32 %s29, 1
        %s183 = smul.addr %s182, 48
        %s184 = scalar_lea.vmem [#allocation2], %s183
        // Predicated region
        $region33: #{tpu_custom_call.1} parent=31 // pred_check
          %p185 = pneg %p42
        $region34: #{tpu_custom_call.1} parent=31 // pred_check_branch
          %187 = sbr.rel (%p185) target = $region36
        $region35: #{tpu_custom_call.1} parent=31 // pred_region
          %189 = dma.done %s181, 768
        $region36: #{tpu_custom_call.1} parent=31 // pred_fallthru
          _
        // Predicated region
        $region37: #{tpu_custom_call.1} parent=31 // pred_check
          %p190 = pneg %p63
        $region38: #{tpu_custom_call.1} parent=31 // pred_check_branch
          %192 = sbr.rel (%p190) target = $region40
        $region39: #{tpu_custom_call.1} parent=31 // pred_region
          %194 = dma.done [#allocation6], 96
        $region40: #{tpu_custom_call.1} parent=31 // pred_fallthru
          _
        // Predicated region
        $region41: #{tpu_custom_call.1} parent=31 // pred_check
          %p195 = pneg %p84
        $region42: #{tpu_custom_call.1} parent=31 // pred_check_branch
          %197 = sbr.rel (%p195) target = $region44
        $region43: #{tpu_custom_call.1} parent=31 // pred_region
          %199 = dma.done [#allocation6], 96
        $region44: #{tpu_custom_call.1} parent=31 // pred_fallthru
          _
        %s200 = sand.u32 %s29, 1
        %s201 = scalar_lea.sflag [#allocation3], %s200
        %s202 = sand.u32 %s29, 1
        %s203 = smul.addr %s202, 48
        %s204 = scalar_lea.vmem [#allocation2], %s203
        %p205 = pneg %p42
        %p206 = pneg %p39
        %p207 = pneg %p63
        %p208 = pneg %p60
        %p209 = pneg %p84
        %p210 = pneg %p81
        %p211 = pneg %p110
        %p212 = pneg %p107
        %s213 = sand.u32 %s97, 1
        %s214 = scalar_lea.sflag [#allocation4], %s213
        %s215 = sand.u32 %s97, 1
        %s216 = smul.addr %s215, 48
        %s217 = scalar_lea.vmem [#allocation8], %s216
        %v218 = vld [vmem:[%s184] sm:$0xff]
        %v219 = vld [vmem:[%s184 + $0x8] sm:$0xff]
        %v220 = vld [vmem:[%s184 + $0x10] sm:$0xff]
        %v221 = vld [vmem:[%s184 + $0x18] sm:$0xff]
        %v222 = vld [vmem:[%s184 + $0x20] sm:$0xff]
        %v223 = vld [vmem:[%s184 + $0x28] sm:$0xff]
        %v224 = vadd.f32 %v218, %v219
        %v225 = vadd.f32 %v224, %v220
        %v226 = vadd.f32 %v225, %v221
        %v227 = vadd.f32 %v226, %v222
        %v228 = vadd.f32 %v227, %v223
        %229 = vadd.xlane.f32.xlu0 %v228
        %v230 = vpop.xlane.xlu0 %229
        %v231 = vrcp.pop 768.0
        %v232 = vmul.f32 768.0, %v231
        %v233 = vsub.f32 1.0, %v232
        %v234 = vmul.f32 %v231, %v233
        %v235 = vadd.f32 %v231, %v234
        %vm236 = vweird.f32 %v231
        %v237 = vsel %vm236, %v231, %v235
        %v238 = vmul.f32 %v230, %v237
        %v239 = vsub.f32 %v218, %v238
        %v240 = vsub.f32 %v219, %v238
        %v241 = vsub.f32 %v220, %v238
        %v242 = vsub.f32 %v221, %v238
        %v243 = vsub.f32 %v222, %v238
        %v244 = vsub.f32 %v223, %v238
        %v245 = vmul.f32 %v239, %v239
        %v246 = vmul.f32 %v240, %v240
        %v247 = vmul.f32 %v241, %v241
        %v248 = vmul.f32 %v242, %v242
        %v249 = vmul.f32 %v243, %v243
        %v250 = vmul.f32 %v244, %v244
        %v251 = vadd.f32 %v245, %v246
        %v252 = vadd.f32 %v251, %v247
        %v253 = vadd.f32 %v252, %v248
        %v254 = vadd.f32 %v253, %v249
        %v255 = vadd.f32 %v254, %v250
        %256 = vadd.xlane.f32.xlu0 %v255
        %v257 = vpop.xlane.xlu0 %256
        %v258 = vmul.f32 %v257, 0.0013037809
        %v259 = vrsqrt.pop %v258
        %v260 = vmul.f32 %v259, %v258
        %v261 = vmul.f32 %v260, %v259
        %v262 = vmul.f32 0.5, %v261
        %v263 = vsub.f32 1.5, %v262
        %v264 = vmul.f32 %v259, %v263
        %v265 = vmul.f32 %v258, %v264
        %vm266 = vcmp.eq.f32.partialorder %v258, inf
        %v267 = vsel %vm266, %v258, %v265
        %vm268 = vcmp.eq.f32.partialorder %v258, 0.0
        %v269 = vand.u32 %v258, 2147483648
        %v270 = vsel %vm268, %v269, %v267
        %v271 = vadd.f32 %v270, 1e-06
        %v272 = vrcp.pop %v271
        %v273 = vmul.f32 %v271, %v272
        %v274 = vsub.f32 1.0, %v273
        %v275 = vmul.f32 %v272, %v274
        %v276 = vadd.f32 %v272, %v275
        %vm277 = vweird.f32 %v271
        %vm278 = vweird.f32 %v272
        %vm279 = vmor %vm277, %vm278
        %v280 = vsel %vm279, %v272, %v276
        %v281 = vand.u32 2147483647, %v271
        %vm282 = vcmp.eq.f32.partialorder %v281, 8.507059e+37
        %v283 = vand.u32 %v271, 2147483648
        %v284 = vor.u32 1.1754944e-38, %v283
        %v285 = vsel %vm282, %v284, %v280
        %v286 = vld [vmem:[#allocation5] sm:$0x3f]
        %v287 = vld [vmem:[#allocation7] sm:$0x3f]
        %v288 = vmul.f32 %v239, %v285
        %v289 = vmul.f32 %v240, %v285
        %v290 = vmul.f32 %v241, %v285
        %v291 = vmul.f32 %v242, %v285
        %v292 = vmul.f32 %v243, %v285
        %v293 = vmul.f32 %v244, %v285
        %v295 = vperm.slane %v286, 0
        %v296 = vperm.slane %v286, 1
        %v297 = vperm.slane %v286, 2
        %v298 = vperm.slane %v286, 3
        %v299 = vperm.slane %v286, 4
        %v300 = vperm.slane %v286, 5
        %v307 = vmul.f32 %v288, %v295
        %v308 = vmul.f32 %v289, %v296
        %v309 = vmul.f32 %v290, %v297
        %v310 = vmul.f32 %v291, %v298
        %v311 = vmul.f32 %v292, %v299
        %v312 = vmul.f32 %v293, %v300
        %v314 = vperm.slane %v287, 0
        %v315 = vperm.slane %v287, 1
        %v316 = vperm.slane %v287, 2
        %v317 = vperm.slane %v287, 3
        %v318 = vperm.slane %v287, 4
        %v319 = vperm.slane %v287, 5
        %v326 = vadd.f32 %v307, %v314
        %v327 = vadd.f32 %v308, %v315
        %v328 = vadd.f32 %v309, %v316
        %v329 = vadd.f32 %v310, %v317
        %v330 = vadd.f32 %v311, %v318
        %v331 = vadd.f32 %v312, %v319
        %332 = vst [vmem:[%s217] sm:$0xff] %v326
        %333 = vst [vmem:[%s217 + $0x8] sm:$0xff] %v327
        %334 = vst [vmem:[%s217 + $0x10] sm:$0xff] %v328
        %335 = vst [vmem:[%s217 + $0x18] sm:$0xff] %v329
        %336 = vst [vmem:[%s217 + $0x20] sm:$0xff] %v330
        %337 = vst [vmem:[%s217 + $0x28] sm:$0xff] %v331
        %s338 = sand.u32 %s97, 1
        %s339 = scalar_lea.sflag [#allocation4], %s338
        %s340 = sand.u32 %s97, 1
        %s341 = smul.addr %s340, 48
        %s342 = scalar_lea.vmem [#allocation8], %s341
        // Predicated region
        $region45: #{tpu_custom_call.1} parent=31 // pred_check
          %p343 = pneg %p107
        $region46: #{tpu_custom_call.1} parent=31 // pred_check_branch
          %345 = sbr.rel (%p343) target = $region48
        $region47: #{tpu_custom_call.1} parent=31 // pred_region
          %347 = vsyncadd %s339, 0
          %s348 = smul.addr %s21, 6
          %s349 = smul.addr %s348, 8
          %s350 = scalar_lea.hbm %s3, %s349
          %s352 = sshll.u32 %s342, 4
          %s353 = int_to_ptr.vmem [resolvable:$true] %s352
          %s354 = sshll.u32 %s350, 4
          %s355 = int_to_ptr.hbm [resolvable:$true] %s354
          %357 = dma.vmem_to_hbm [thread:$0]  %s353, 768, %s355, %s339
        $region48: #{tpu_custom_call.1} parent=31 // pred_fallthru
          _
      $region32: #{tpu_custom_call.1} parent=5 // pred_fallthru
        _
      %p358 = scmp.le.s32.totalorder 2, %s16
      // Predicated region
      $region49: #{tpu_custom_call.1} parent=5 // pred_check
        %p359 = pneg %p358
      $region50: #{tpu_custom_call.1} parent=5 // pred_check_branch
        %361 = sbr.rel (%p359) target = $region52
      $region51: #{tpu_custom_call.1} parent=5 // pred_region
        %s362 = ssub.s32 %s16, 2
        // Predicated region
        $region53: #{tpu_custom_call.1} parent=51 // pred_check
          %p363 = pneg %p113
        $region54: #{tpu_custom_call.1} parent=51 // pred_check_branch
          %365 = sbr.rel (%p363) target = $region56
        $region55: #{tpu_custom_call.1} parent=51 // pred_region
          %s366 = sand.u32 %s98, 1
          %s367 = scalar_lea.sflag [#allocation4], %s366
          %s368 = sand.u32 %s98, 1
          %s369 = smul.addr %s368, 48
          %s370 = scalar_lea.vmem [#allocation8], %s369
          %372 = dma.done %s367, 768
        $region56: #{tpu_custom_call.1} parent=51 // pred_fallthru
          _
      $region52: #{tpu_custom_call.1} parent=5 // pred_fallthru
        _
    $region6: #{tpu_custom_call.1} parent=1 // loop_footer
      %s20 = sadd.s32 1, %s16
    $region7: #{tpu_custom_call.1} parent=1 // loop_footer_branch
      %15 = sbr.rel target = $region3
    $region8: #{tpu_custom_call.1} parent=1 // loop_exit
      _
    %373 = vsyncpa [#allocation3], 1
    %s374 = scalar_lea.sflag [#allocation3], 1
    %375 = vsyncpa %s374, 1
    %376 = vsyncpa [#allocation6], 1
    %377 = vsyncpa [#allocation4], 1
    %s378 = scalar_lea.sflag [#allocation4], 1
    %379 = vsyncpa %s378, 1

</llo_original>
